<compile_context>
chip_gen: v7x
topology: tpu7x:2x2x1
jax: 0.10.0
libtpu: 0.0.40
codegen_flags: <defaults>
</compile_context>

<pallas_src>
import functools

import jax
import jax.numpy as jnp
from jax.experimental import pallas as pl
from jax.experimental.pallas import tpu as pltpu


def ftb_kernel(alpha_ref,                        # SMEM scalar-prefetch: (1,) f32
               x_ref,                            # (bb, C, HWp) f32
               w1_ref, b1_ref,                   # (C, C), (C, 1)
               wf1s_ref, bf1_ref,                # (C, C) pre-scaled by 1/HW, (C, 1)
               wf2_ref, bf2_ref,                 # (C, C), (C, 1)
               o_ref,                            # (bb, C, HWp)
               pooled_ref,                       # VMEM scratch (C, bb) f32
               *, hw_valid):
    alpha = alpha_ref[0]
    bb, _, hw_pad = x_ref.shape

    # Weights/biases loaded once per grid step (hoisted out of the loops).
    w1 = w1_ref[...]
    b1 = b1_ref[...]

    need_mask = hw_pad != hw_valid
    if need_mask:
        lane = jax.lax.broadcasted_iota(jnp.int32, (1, hw_pad), 1)
        valid = lane < hw_valid

    # ---- pass 1: conv1 (1x1) + PReLU + spatial sum, per image (unrolled) ----
    for i in range(bb):
        x = x_ref[i]                                                # (C, HWp)
        y = jnp.dot(w1, x, preferred_element_type=jnp.float32) + b1
        y = jnp.where(y >= 0.0, y, alpha * y)                       # PReLU
        if need_mask:
            y = jnp.where(valid, y, 0.0)                            # zero pad lanes
        pooled_ref[:, i:i + 1] = jnp.sum(y, axis=1, keepdims=True)  # (C, 1)

    # ---- batched squeeze-excite: fc1 -> ReLU -> fc2 -> sigmoid -------------
    pooled = pooled_ref[...]                                        # (C, bb)
    h = jnp.dot(wf1s_ref[...], pooled,
                preferred_element_type=jnp.float32) + bf1_ref[...]
    h = jnp.maximum(h, 0.0)
    g = jnp.dot(wf2_ref[...], h,
                preferred_element_type=jnp.float32) + bf2_ref[...]
    g = jax.nn.sigmoid(g)                                           # (C, bb)

    # ---- pass 2: gate the residual (lane-dense stores) ---------------------
    for i in range(bb):
        o_ref[i] = (g[:, i:i + 1] * x_ref[i]).astype(o_ref.dtype)


def _pick_batch_block(B, C, hw_pad, *, target_bytes=4 << 20, max_unroll=64):
    """Batch-block size: ~4 MiB input slab, bounded unroll, >=2 grid steps."""
    per_image = C * hw_pad * 4
    bb = max(1, target_bytes // max(per_image, 1))
    bb = min(bb, max_unroll, B)
    if B >= 2:
        bb = min(bb, max(1, B // 2))   # keep >= 2 grid steps (v7x: 2 TCs)
    return int(max(1, bb))


def ftb_forward(x_nchw, params):
    """x_nchw: (B, C, H, W) float32.  Returns (B, C, H, W) float32."""
    B, C, H, W = x_nchw.shape
    HW = H * W
    hw_pad = max(128, ((HW + 127) // 128) * 128)   # lane-dense last dim

    x = x_nchw.reshape(B, C, HW)

    bb = _pick_batch_block(B, C, hw_pad)
    nsteps = pl.cdiv(B, bb)
    b_pad = nsteps * bb

    if hw_pad != HW or b_pad != B:
        x = jnp.pad(x, ((0, b_pad - B), (0, 0), (0, hw_pad - HW)))

    w1 = params["w1"]                         # (C, C)
    b1 = params["b1"].reshape(C, 1)
    alpha = params["alpha"].reshape(1)
    wf1s = params["wf1"] / jnp.float32(HW)    # fold 1/HW pooling scale into fc1
    bf1 = params["bf1"].reshape(C, 1)
    wf2 = params["wf2"]                       # (C, C)
    bf2 = params["bf2"].reshape(C, 1)

    slab = bb * C * hw_pad * 4                # per-step input slab
    # budget: in + out, double-buffered, plus weights/scratch; stay <= 48 MiB
    vmem_limit = int(min(48 << 20, max(32 << 20, 4 * slab + (2 << 20))))

    kernel = functools.partial(ftb_kernel, hw_valid=HW)

    out = pl.pallas_call(
        kernel,
        out_shape=jax.ShapeDtypeStruct((b_pad, C, hw_pad), x.dtype),
        grid_spec=pltpu.PrefetchScalarGridSpec(
            num_scalar_prefetch=1,            # alpha -> SMEM
            grid=(nsteps,),
            in_specs=[
                pl.BlockSpec((bb, C, hw_pad), lambda b, a: (b, 0, 0)),  # x
                pl.BlockSpec((C, C), lambda b, a: (0, 0)),              # conv1 W
                pl.BlockSpec((C, 1), lambda b, a: (0, 0)),              # conv1 b
                pl.BlockSpec((C, C), lambda b, a: (0, 0)),              # fc1 W/HW
                pl.BlockSpec((C, 1), lambda b, a: (0, 0)),              # fc1 b
                pl.BlockSpec((C, C), lambda b, a: (0, 0)),              # fc2 W
                pl.BlockSpec((C, 1), lambda b, a: (0, 0)),              # fc2 b
            ],
            out_specs=pl.BlockSpec((bb, C, hw_pad), lambda b, a: (b, 0, 0)),
            scratch_shapes=[pltpu.VMEM((C, bb), jnp.float32)],          # pooled
        ),
        compiler_params=pltpu.CompilerParams(
            dimension_semantics=("parallel",),
            vmem_limit_bytes=vmem_limit),
    )(alpha, x, w1, b1, wf1s, bf1, wf2, bf2)

    return out[:B, :, :HW].reshape(B, C, H, W)


def ftb_reference(x_nchw, params):
    """Pure-JAX reference mirroring the PyTorch forward semantics."""
    B, C, H, W = x_nchw.shape
    x = x_nchw.reshape(B, C, H * W)
    y = jnp.einsum('oc,bcl->bol', params["w1"], x) + params["b1"][None, :, None]
    a = params["alpha"][0]
    y = jnp.where(y >= 0.0, y, a * y)
    pooled = jnp.mean(y, axis=2)                                   # (B, C)
    h = pooled @ params["wf1"].T + params["bf1"][None, :]
    h = jnp.maximum(h, 0.0)
    g = h @ params["wf2"].T + params["bf2"][None, :]
    g = jax.nn.sigmoid(g)                                          # (B, C)
    return (g[:, :, None] * x).reshape(B, C, H, W)


def init_params(key, n_feat):
    ks = jax.random.split(key, 6)
    s = 0.1
    return {
        "w1":  s * jax.random.normal(ks[0], (n_feat, n_feat), jnp.float32),
        "b1":  s * jax.random.normal(ks[1], (n_feat,), jnp.float32),
        "alpha": jnp.full((1,), 0.25, jnp.float32),   # PReLU default init
        "wf1": s * jax.random.normal(ks[2], (n_feat, n_feat), jnp.float32),
        "bf1": s * jax.random.normal(ks[3], (n_feat,), jnp.float32),
        "wf2": s * jax.random.normal(ks[4], (n_feat, n_feat), jnp.float32),
        "bf2": s * jax.random.normal(ks[5], (n_feat,), jnp.float32),
    }


if __name__ == "__main__":
    key = jax.random.PRNGKey(0)
    k_x, k_p = jax.random.split(key)

    B, C, H, W = 2, 16, 16, 16
    x = jax.random.normal(k_x, (B, C, H, W), jnp.float32)
    params = init_params(k_p, C)

    out = ftb_forward(x, params)
    out = jax.block_until_ready(out)

    ref = jax.block_until_ready(ftb_reference(x, params))
    assert out.shape == (B, C, H, W)
    assert jnp.allclose(out, ref, atol=1e-5, rtol=1e-5), \
        f"max abs err = {jnp.max(jnp.abs(out - ref))}"

    print("KERNEL_OK")
</pallas_src>

<mosaic_0001>
module attributes {stable_mosaic.version = 11 : i64} {
  func.func @ftb_kernel(%arg0: i32, %arg1: memref<1xf32, #tpu.memory_space<smem>>, %arg2: memref<1x16x256xf32, #tpu.memory_space<vmem>>, %arg3: memref<16x16xf32, #tpu.memory_space<vmem>>, %arg4: memref<16x1xf32, #tpu.memory_space<vmem>>, %arg5: memref<16x16xf32, #tpu.memory_space<vmem>>, %arg6: memref<16x1xf32, #tpu.memory_space<vmem>>, %arg7: memref<16x16xf32, #tpu.memory_space<vmem>>, %arg8: memref<16x1xf32, #tpu.memory_space<vmem>>, %arg9: memref<1x16x256xf32, #tpu.memory_space<vmem>>, %arg10: memref<16x1xf32, #tpu.memory_space<vmem>>) attributes {dimension_semantics = [#tpu.dimension_semantics<parallel>], iteration_bounds = array<i64: 2>, scalar_prefetch = 1 : i64, scratch_operands = 1 : i64, tpu.core_type = #tpu.core_type<tc>, window_params = [{transform_indices = @transform_0, window_bounds = array<i64: 1, 16, 256>}, {pipeline_mode = #tpu.pipeline_mode<synchronous>, transform_indices = @transform_1, window_bounds = array<i64: 16, 16>}, {pipeline_mode = #tpu.pipeline_mode<synchronous>, transform_indices = @transform_2, window_bounds = array<i64: 16, 1>}, {pipeline_mode = #tpu.pipeline_mode<synchronous>, transform_indices = @transform_3, window_bounds = array<i64: 16, 16>}, {pipeline_mode = #tpu.pipeline_mode<synchronous>, transform_indices = @transform_4, window_bounds = array<i64: 16, 1>}, {pipeline_mode = #tpu.pipeline_mode<synchronous>, transform_indices = @transform_5, window_bounds = array<i64: 16, 16>}, {pipeline_mode = #tpu.pipeline_mode<synchronous>, transform_indices = @transform_6, window_bounds = array<i64: 16, 1>}, {transform_indices = @transform_7, window_bounds = array<i64: 1, 16, 256>}]} {
    %c0 = arith.constant 0 : index
    %0 = memref.load %arg1[%c0] : memref<1xf32, #tpu.memory_space<smem>>
    %c0_0 = arith.constant 0 : index
    %c0_1 = arith.constant 0 : index
    %1 = vector.load %arg3[%c0_0, %c0_1] : memref<16x16xf32, #tpu.memory_space<vmem>>, vector<16x16xf32>
    %c0_2 = arith.constant 0 : index
    %c0_3 = arith.constant 0 : index
    %2 = vector.load %arg4[%c0_2, %c0_3] : memref<16x1xf32, #tpu.memory_space<vmem>>, vector<16x1xf32>
    %c0_4 = arith.constant 0 : index
    %c0_5 = arith.constant 0 : index
    %c0_6 = arith.constant 0 : index
    %3 = vector.load %arg2[%c0_4, %c0_5, %c0_6] : memref<1x16x256xf32, #tpu.memory_space<vmem>>, vector<1x16x256xf32>
    %4 = vector.shape_cast %3 : vector<1x16x256xf32> to vector<16x256xf32>
    %cst = arith.constant dense<0.000000e+00> : vector<16x256xf32>
    %5 = tpu.matmul %1, %4, %cst {dimension_numbers = #tpu.dot_dimension_numbers<[1], [0], [0], [1], [0, 0, 1, 1], [], []>} : vector<16x16xf32>, vector<16x256xf32>, vector<16x256xf32> -> vector<16x256xf32>
    %6 = vector.broadcast %2 : vector<16x1xf32> to vector<16x256xf32>
    %7 = arith.addf %5, %6 : vector<16x256xf32>
    %cst_7 = arith.constant 0.000000e+00 : f32
    %8 = vector.broadcast %cst_7 : f32 to vector<16x256xf32>
    %9 = arith.cmpf oge, %7, %8 : vector<16x256xf32>
    %10 = vector.broadcast %0 : f32 to vector<16x256xf32>
    %11 = arith.mulf %10, %7 : vector<16x256xf32>
    %12 = arith.select %9, %7, %11 : vector<16x256xi1>, vector<16x256xf32>
    %cst_8 = arith.constant dense<0.000000e+00> : vector<16xf32>
    %13 = vector.multi_reduction <add>, %12, %cst_8 [1] : vector<16x256xf32> to vector<16xf32>
    %14 = vector.shape_cast %13 : vector<16xf32> to vector<16x1xf32>
    %c0_9 = arith.constant 0 : index
    %c0_10 = arith.constant 0 : index
    %15 = vector.load %arg10[%c0_9, %c0_10] : memref<16x1xf32, #tpu.memory_space<vmem>>, vector<16x1xf32>
    tpu.vector_store %arg10[%c0_9, %c0_10], %14 {strides = array<i32>} : memref<16x1xf32, #tpu.memory_space<vmem>>, vector<16x1xf32>,
    %c0_11 = arith.constant 0 : index
    %c0_12 = arith.constant 0 : index
    %16 = vector.load %arg10[%c0_11, %c0_12] : memref<16x1xf32, #tpu.memory_space<vmem>>, vector<16x1xf32>
    %c0_13 = arith.constant 0 : index
    %c0_14 = arith.constant 0 : index
    %17 = vector.load %arg5[%c0_13, %c0_14] : memref<16x16xf32, #tpu.memory_space<vmem>>, vector<16x16xf32>
    %cst_15 = arith.constant dense<0.000000e+00> : vector<16x1xf32>
    %18 = tpu.matmul %17, %16, %cst_15 {dimension_numbers = #tpu.dot_dimension_numbers<[1], [0], [0], [1], [0, 0, 1, 1], [], []>} : vector<16x16xf32>, vector<16x1xf32>, vector<16x1xf32> -> vector<16x1xf32>
    %c0_16 = arith.constant 0 : index
    %c0_17 = arith.constant 0 : index
    %19 = vector.load %arg6[%c0_16, %c0_17] : memref<16x1xf32, #tpu.memory_space<vmem>>, vector<16x1xf32>
    %20 = arith.addf %18, %19 : vector<16x1xf32>
    %cst_18 = arith.constant 0.000000e+00 : f32
    %21 = vector.broadcast %cst_18 : f32 to vector<16x1xf32>
    %22 = arith.maximumf %20, %21 : vector<16x1xf32>
    %c0_19 = arith.constant 0 : index
    %c0_20 = arith.constant 0 : index
    %23 = vector.load %arg7[%c0_19, %c0_20] : memref<16x16xf32, #tpu.memory_space<vmem>>, vector<16x16xf32>
    %cst_21 = arith.constant dense<0.000000e+00> : vector<16x1xf32>
    %24 = tpu.matmul %23, %22, %cst_21 {dimension_numbers = #tpu.dot_dimension_numbers<[1], [0], [0], [1], [0, 0, 1, 1], [], []>} : vector<16x16xf32>, vector<16x1xf32>, vector<16x1xf32> -> vector<16x1xf32>
    %c0_22 = arith.constant 0 : index
    %c0_23 = arith.constant 0 : index
    %25 = vector.load %arg8[%c0_22, %c0_23] : memref<16x1xf32, #tpu.memory_space<vmem>>, vector<16x1xf32>
    %26 = arith.addf %24, %25 : vector<16x1xf32>
    %27 = arith.negf %26 : vector<16x1xf32>
    %28 = math.exp %27 : vector<16x1xf32>
    %cst_24 = arith.constant 1.000000e+00 : f32
    %29 = vector.broadcast %cst_24 : f32 to vector<16x1xf32>
    %30 = arith.addf %29, %28 : vector<16x1xf32>
    %31 = arith.divf %29, %30 : vector<16x1xf32>
    %c0_25 = arith.constant 0 : index
    %c0_26 = arith.constant 0 : index
    %c0_27 = arith.constant 0 : index
    %32 = vector.load %arg2[%c0_25, %c0_26, %c0_27] : memref<1x16x256xf32, #tpu.memory_space<vmem>>, vector<1x16x256xf32>
    %33 = vector.shape_cast %32 : vector<1x16x256xf32> to vector<16x256xf32>
    %34 = vector.broadcast %31 : vector<16x1xf32> to vector<16x256xf32>
    %35 = arith.mulf %34, %33 : vector<16x256xf32>
    %c0_28 = arith.constant 0 : index
    %c0_29 = arith.constant 0 : index
    %c0_30 = arith.constant 0 : index
    %36 = vector.load %arg9[%c0_28, %c0_29, %c0_30] : memref<1x16x256xf32, #tpu.memory_space<vmem>>, vector<1x16x256xf32>
    %37 = vector.shape_cast %36 : vector<1x16x256xf32> to vector<16x256xf32>
    %38 = vector.shape_cast %35 : vector<16x256xf32> to vector<1x16x256xf32>
    tpu.vector_store %arg9[%c0_28, %c0_29, %c0_30], %38 {strides = array<i32>} : memref<1x16x256xf32, #tpu.memory_space<vmem>>, vector<1x16x256xf32>,
    return
  }
  func.func @transform_0(%arg0: i32, %arg1: memref<1xf32, #tpu.memory_space<smem>>) -> (i32, i32, i32) {
    %c0_i32 = arith.constant 0 : i32
    %c0_i32_0 = arith.constant 0 : i32
    %c0_i32_1 = arith.constant 0 : i32
    return %arg0, %c0_i32, %c0_i32_0 : i32, i32, i32
  }
  func.func @transform_1(%arg0: i32, %arg1: memref<1xf32, #tpu.memory_space<smem>>) -> (i32, i32) {
    %c0_i32 = arith.constant 0 : i32
    %c0_i32_0 = arith.constant 0 : i32
    %c0_i32_1 = arith.constant 0 : i32
    return %c0_i32, %c0_i32_0 : i32, i32
  }
  func.func @transform_2(%arg0: i32, %arg1: memref<1xf32, #tpu.memory_space<smem>>) -> (i32, i32) {
    %c0_i32 = arith.constant 0 : i32
    %c0_i32_0 = arith.constant 0 : i32
    %c0_i32_1 = arith.constant 0 : i32
    return %c0_i32, %c0_i32_0 : i32, i32
  }
  func.func @transform_3(%arg0: i32, %arg1: memref<1xf32, #tpu.memory_space<smem>>) -> (i32, i32) {
    %c0_i32 = arith.constant 0 : i32
    %c0_i32_0 = arith.constant 0 : i32
    %c0_i32_1 = arith.constant 0 : i32
    return %c0_i32, %c0_i32_0 : i32, i32
  }
  func.func @transform_4(%arg0: i32, %arg1: memref<1xf32, #tpu.memory_space<smem>>) -> (i32, i32) {
    %c0_i32 = arith.constant 0 : i32
    %c0_i32_0 = arith.constant 0 : i32
    %c0_i32_1 = arith.constant 0 : i32
    return %c0_i32, %c0_i32_0 : i32, i32
  }
  func.func @transform_5(%arg0: i32, %arg1: memref<1xf32, #tpu.memory_space<smem>>) -> (i32, i32) {
    %c0_i32 = arith.constant 0 : i32
    %c0_i32_0 = arith.constant 0 : i32
    %c0_i32_1 = arith.constant 0 : i32
    return %c0_i32, %c0_i32_0 : i32, i32
  }
  func.func @transform_6(%arg0: i32, %arg1: memref<1xf32, #tpu.memory_space<smem>>) -> (i32, i32) {
    %c0_i32 = arith.constant 0 : i32
    %c0_i32_0 = arith.constant 0 : i32
    %c0_i32_1 = arith.constant 0 : i32
    return %c0_i32, %c0_i32_0 : i32, i32
  }
  func.func @transform_7(%arg0: i32, %arg1: memref<1xf32, #tpu.memory_space<smem>>) -> (i32, i32, i32) {
    %c0_i32 = arith.constant 0 : i32
    %c0_i32_0 = arith.constant 0 : i32
    %c0_i32_1 = arith.constant 0 : i32
    return %arg0, %c0_i32, %c0_i32_0 : i32, i32, i32
  }
}

</mosaic_0001>

<llo_original>
// kernel: tpu_custom_call.1
$region0: #{tpu_custom_call.1}
  #allocation0 [shape = 'u32[]', space=smem, size = 0x4, offset = 0x4, fixed_abs, tag = 'smem constant byte address 0x4 - core index']
  #allocation1 [shape = 'u32[144,128]{1,0:T(1,128)}', space=vmem, size = 0x12000, scoped, tag = 'internal scratch']
  #allocation2 [shape = 'f32[16,1]{1,0:T(8,128)}', space=vmem, size = 0x2000, scoped, tag = 'scratch operand']
  #allocation3 [shape = 's32[1]{0}', space=sflag, size = 0x4, scoped, tag = 'scoped memory for tpu_custom_call.1']
  #allocation4 [shape = 'f32[1]{0:T(128)S(6)}', space=smem, size = 0x200, scoped, tag = 'prefetched SMEM operand 0']
  %s0 = inlined_call_operand.<no memory space> [shape: f32[1], index: 0, kind: input, shape index: {}]
  %s1 = inlined_call_operand.hbm [shape: f32[2,16,256], index: 1, kind: input, shape index: {}]
  %s2 = inlined_call_operand.vmem [shape: f32[16,16], index: 2, kind: input, shape index: {}]
  %s3 = inlined_call_operand.vmem [shape: f32[16,1], index: 3, kind: input, shape index: {}]
  %s4 = inlined_call_operand.vmem [shape: f32[16,16], index: 4, kind: input, shape index: {}]
  %s5 = inlined_call_operand.vmem [shape: f32[16,1], index: 5, kind: input, shape index: {}]
  %s6 = inlined_call_operand.vmem [shape: f32[16,16], index: 6, kind: input, shape index: {}]
  %s7 = inlined_call_operand.vmem [shape: f32[16,1], index: 7, kind: input, shape index: {}]
  %s8 = inlined_call_operand.hbm [shape: f32[2,16,256], index: 8, kind: output, shape index: {}]
  %s9 = sld [smem:[#allocation0]]
  $region65: #{tpu_custom_call.1} parent=0
    _
  %s11 = ssub.s32 1, %s9
  %s12 = scalar_select 0, %s11, %s9
  %13 = sst [smem:[#allocation4]] %s0
  $region1: #{tpu_custom_call.1} parent=0
    #allocation5 [shape = 'u8[32768]{0}', space=vmem, size = 0x8000, scoped, tag = 'input window, operand 1']
    #allocation6 [shape = 's32[2]{0}', space=sflag, size = 0x8, scoped, tag = 'scoped memory for tpu_custom_call.1']
    #allocation7 [shape = 's32[2]{0}', space=sflag, size = 0x8, scoped, tag = 'scoped memory for tpu_custom_call.1']
    #allocation8 [shape = 'u8[32768]{0}', space=vmem, size = 0x8000, scoped, tag = 'output window, operand 0']
    %14 = vsyncpa [#allocation6], 0
    %s15 = scalar_lea.sflag [#allocation6], 1
    %16 = vsyncpa %s15, 0
    %17 = vsyncpa [#allocation7], 0
    %s18 = scalar_lea.sflag [#allocation7], 1
    %19 = vsyncpa %s18, 0
    loop: start=0, step=1, limit=4
    $region2: #{tpu_custom_call.1} parent=1 // loop_pre_header
      _
    $region3: #{tpu_custom_call.1} parent=1 // loop_header
      %s21 = sphi 0, %s25
      %p22 = scmp.ge.s32.totalorder %s21, 4
      %s31 = sphi 0, %s33
      %s34 = sphi 0, %s31
      %s35 = sphi 0, %s34
      %s51 = sphi 0, %s35
      %s55 = sphi 0, %s55
      %s57 = sphi 0, %s55
      %s58 = sphi 0, %s57
      %s72 = sphi 0, %s58
      %s76 = sphi 0, %s76
      %s78 = sphi 0, %s76
      %s79 = sphi 0, %s78
      %s93 = sphi 0, %s79
      %s97 = sphi 0, %s97
      %s99 = sphi 0, %s97
      %s100 = sphi 0, %s99
      %s114 = sphi 0, %s100
      %s118 = sphi 0, %s118
      %s120 = sphi 0, %s118
      %s121 = sphi 0, %s120
      %s135 = sphi 0, %s121
      %s139 = sphi 0, %s139
      %s141 = sphi 0, %s139
      %s142 = sphi 0, %s141
      %s156 = sphi 0, %s142
      %s160 = sphi 0, %s160
      %s162 = sphi 0, %s160
      %s163 = sphi 0, %s162
      %s177 = sphi 0, %s163
      %s183 = sphi 0, %s185
      %s186 = sphi 0, %s183
      %s187 = sphi 0, %s186
      %s203 = sphi 0, %s187
    $region4: #{tpu_custom_call.1} parent=1 // loop_header_branch
      %24 = sbr.rel (%p22) target = $region8
    $region5: #{tpu_custom_call.1} parent=1 // loop_body
      %s26 = ssub.s32 %s21, 1
      %s27 = ssub.s32 %s21, 2
      %s28 = sadd.s32 %s21, 1
      %s29 = ssub.s32 %s21, %s28
      %p30 = scmp.eq.s32.totalorder %s29, 0
      %s32 = sadd.s32 %s31, 1
      %s33 = scalar_select %p30, %s31, %s32
      %p36 = pneg %p30
      %p37 = scmp.eq.s32.totalorder %s21, 1
      %p38 = por %p36, %p37
      %p39 = scmp.ne.s32.totalorder %s31, %s34
      %p40 = scmp.eq.s32.totalorder %s21, 0
      %p41 = por %p39, %p40
      %p42 = scmp.ne.s32.totalorder %s31, %s34
      %p43 = scmp.eq.s32.totalorder %s26, 1
      %p44 = por %p42, %p43
      %p45 = scmp.ne.s32.totalorder %s34, %s35
      %p46 = scmp.eq.s32.totalorder %s26, 0
      %p47 = por %p45, %p46
      %p48 = scmp.ne.s32.totalorder %s34, %s35
      %p49 = scmp.eq.s32.totalorder %s27, 1
      %p50 = por %p48, %p49
      %p52 = scmp.ne.s32.totalorder %s35, %s51
      %p53 = scmp.eq.s32.totalorder %s27, 0
      %p54 = por %p52, %p53
      %s56 = sadd.s32 %s55, 1
      %p59 = scmp.eq.s32.totalorder %s21, 1
      %p60 = scmp.ne.s32.totalorder %s55, %s57
      %p61 = scmp.eq.s32.totalorder %s21, 0
      %p62 = por %p60, %p61
      %p63 = scmp.ne.s32.totalorder %s55, %s57
      %p64 = scmp.eq.s32.totalorder %s26, 1
      %p65 = por %p63, %p64
      %p66 = scmp.ne.s32.totalorder %s57, %s58
      %p67 = scmp.eq.s32.totalorder %s26, 0
      %p68 = por %p66, %p67
      %p69 = scmp.ne.s32.totalorder %s57, %s58
      %p70 = scmp.eq.s32.totalorder %s27, 1
      %p71 = por %p69, %p70
      %p73 = scmp.ne.s32.totalorder %s58, %s72
      %p74 = scmp.eq.s32.totalorder %s27, 0
      %p75 = por %p73, %p74
      %s77 = sadd.s32 %s76, 1
      %p80 = scmp.eq.s32.totalorder %s21, 1
      %p81 = scmp.ne.s32.totalorder %s76, %s78
      %p82 = scmp.eq.s32.totalorder %s21, 0
      %p83 = por %p81, %p82
      %p84 = scmp.ne.s32.totalorder %s76, %s78
      %p85 = scmp.eq.s32.totalorder %s26, 1
      %p86 = por %p84, %p85
      %p87 = scmp.ne.s32.totalorder %s78, %s79
      %p88 = scmp.eq.s32.totalorder %s26, 0
      %p89 = por %p87, %p88
      %p90 = scmp.ne.s32.totalorder %s78, %s79
      %p91 = scmp.eq.s32.totalorder %s27, 1
      %p92 = por %p90, %p91
      %p94 = scmp.ne.s32.totalorder %s79, %s93
      %p95 = scmp.eq.s32.totalorder %s27, 0
      %p96 = por %p94, %p95
      %s98 = sadd.s32 %s97, 1
      %p101 = scmp.eq.s32.totalorder %s21, 1
      %p102 = scmp.ne.s32.totalorder %s97, %s99
      %p103 = scmp.eq.s32.totalorder %s21, 0
      %p104 = por %p102, %p103
      %p105 = scmp.ne.s32.totalorder %s97, %s99
      %p106 = scmp.eq.s32.totalorder %s26, 1
      %p107 = por %p105, %p106
      %p108 = scmp.ne.s32.totalorder %s99, %s100
      %p109 = scmp.eq.s32.totalorder %s26, 0
      %p110 = por %p108, %p109
      %p111 = scmp.ne.s32.totalorder %s99, %s100
      %p112 = scmp.eq.s32.totalorder %s27, 1
      %p113 = por %p111, %p112
      %p115 = scmp.ne.s32.totalorder %s100, %s114
      %p116 = scmp.eq.s32.totalorder %s27, 0
      %p117 = por %p115, %p116
      %s119 = sadd.s32 %s118, 1
      %p122 = scmp.eq.s32.totalorder %s21, 1
      %p123 = scmp.ne.s32.totalorder %s118, %s120
      %p124 = scmp.eq.s32.totalorder %s21, 0
      %p125 = por %p123, %p124
      %p126 = scmp.ne.s32.totalorder %s118, %s120
      %p127 = scmp.eq.s32.totalorder %s26, 1
      %p128 = por %p126, %p127
      %p129 = scmp.ne.s32.totalorder %s120, %s121
      %p130 = scmp.eq.s32.totalorder %s26, 0
      %p131 = por %p129, %p130
      %p132 = scmp.ne.s32.totalorder %s120, %s121
      %p133 = scmp.eq.s32.totalorder %s27, 1
      %p134 = por %p132, %p133
      %p136 = scmp.ne.s32.totalorder %s121, %s135
      %p137 = scmp.eq.s32.totalorder %s27, 0
      %p138 = por %p136, %p137
      %s140 = sadd.s32 %s139, 1
      %p143 = scmp.eq.s32.totalorder %s21, 1
      %p144 = scmp.ne.s32.totalorder %s139, %s141
      %p145 = scmp.eq.s32.totalorder %s21, 0
      %p146 = por %p144, %p145
      %p147 = scmp.ne.s32.totalorder %s139, %s141
      %p148 = scmp.eq.s32.totalorder %s26, 1
      %p149 = por %p147, %p148
      %p150 = scmp.ne.s32.totalorder %s141, %s142
      %p151 = scmp.eq.s32.totalorder %s26, 0
      %p152 = por %p150, %p151
      %p153 = scmp.ne.s32.totalorder %s141, %s142
      %p154 = scmp.eq.s32.totalorder %s27, 1
      %p155 = por %p153, %p154
      %p157 = scmp.ne.s32.totalorder %s142, %s156
      %p158 = scmp.eq.s32.totalorder %s27, 0
      %p159 = por %p157, %p158
      %s161 = sadd.s32 %s160, 1
      %p164 = scmp.eq.s32.totalorder %s21, 1
      %p165 = scmp.ne.s32.totalorder %s160, %s162
      %p166 = scmp.eq.s32.totalorder %s21, 0
      %p167 = por %p165, %p166
      %p168 = scmp.ne.s32.totalorder %s160, %s162
      %p169 = scmp.eq.s32.totalorder %s26, 1
      %p170 = por %p168, %p169
      %p171 = scmp.ne.s32.totalorder %s162, %s163
      %p172 = scmp.eq.s32.totalorder %s26, 0
      %p173 = por %p171, %p172
      %p174 = scmp.ne.s32.totalorder %s162, %s163
      %p175 = scmp.eq.s32.totalorder %s27, 1
      %p176 = por %p174, %p175
      %p178 = scmp.ne.s32.totalorder %s163, %s177
      %p179 = scmp.eq.s32.totalorder %s27, 0
      %p180 = por %p178, %p179
      %s181 = ssub.s32 %s21, %s28
      %p182 = scmp.eq.s32.totalorder %s181, 0
      %s184 = sadd.s32 %s183, 1
      %s185 = scalar_select %p182, %s183, %s184
      %p188 = pneg %p182
      %p189 = scmp.eq.s32.totalorder %s21, 1
      %p190 = por %p188, %p189
      %p191 = scmp.ne.s32.totalorder %s183, %s186
      %p192 = scmp.eq.s32.totalorder %s21, 0
      %p193 = por %p191, %p192
      %p194 = scmp.ne.s32.totalorder %s183, %s186
      %p195 = scmp.eq.s32.totalorder %s26, 1
      %p196 = por %p194, %p195
      %p197 = scmp.ne.s32.totalorder %s186, %s187
      %p198 = scmp.eq.s32.totalorder %s26, 0
      %p199 = por %p197, %p198
      %p200 = scmp.ne.s32.totalorder %s186, %s187
      %p201 = scmp.eq.s32.totalorder %s27, 1
      %p202 = por %p200, %p201
      %p204 = scmp.ne.s32.totalorder %s187, %s203
      %p205 = scmp.eq.s32.totalorder %s27, 0
      %p206 = por %p204, %p205
      %p207 = scmp.le.s32.totalorder 1, %s21
      %p208 = scmp.lt.s32.totalorder %s21, 3
      %p209 = pnand %p207, %p208
      %p210 = pneg %p209
      // Predicated region
      $region9: #{tpu_custom_call.1} parent=5 // pred_check
        _
      $region10: #{tpu_custom_call.1} parent=5 // pred_check_branch
        %212 = sbr.rel (%p209) target = $region12
      $region11: #{tpu_custom_call.1} parent=5 // pred_region
        %s213 = ssub.s32 %s21, 1
        // Predicated region
        $region13: #{tpu_custom_call.1} parent=11 // pred_check
          %p214 = pneg %p68
        $region14: #{tpu_custom_call.1} parent=11 // pred_check_branch
          %216 = sbr.rel (%p214) target = $region16
        $region15: #{tpu_custom_call.1} parent=11 // pred_region
          _
        $region16: #{tpu_custom_call.1} parent=11 // pred_fallthru
          _
        // Predicated region
        $region17: #{tpu_custom_call.1} parent=11 // pred_check
          %p217 = pneg %p89
        $region18: #{tpu_custom_call.1} parent=11 // pred_check_branch
          %219 = sbr.rel (%p217) target = $region20
        $region19: #{tpu_custom_call.1} parent=11 // pred_region
          _
        $region20: #{tpu_custom_call.1} parent=11 // pred_fallthru
          _
        // Predicated region
        $region21: #{tpu_custom_call.1} parent=11 // pred_check
          %p220 = pneg %p110
        $region22: #{tpu_custom_call.1} parent=11 // pred_check_branch
          %222 = sbr.rel (%p220) target = $region24
        $region23: #{tpu_custom_call.1} parent=11 // pred_region
          _
        $region24: #{tpu_custom_call.1} parent=11 // pred_fallthru
          _
        // Predicated region
        $region25: #{tpu_custom_call.1} parent=11 // pred_check
          %p223 = pneg %p131
        $region26: #{tpu_custom_call.1} parent=11 // pred_check_branch
          %225 = sbr.rel (%p223) target = $region28
        $region27: #{tpu_custom_call.1} parent=11 // pred_region
          _
        $region28: #{tpu_custom_call.1} parent=11 // pred_fallthru
          _
        // Predicated region
        $region29: #{tpu_custom_call.1} parent=11 // pred_check
          %p226 = pneg %p152
        $region30: #{tpu_custom_call.1} parent=11 // pred_check_branch
          %228 = sbr.rel (%p226) target = $region32
        $region31: #{tpu_custom_call.1} parent=11 // pred_region
          _
        $region32: #{tpu_custom_call.1} parent=11 // pred_fallthru
          _
        // Predicated region
        $region33: #{tpu_custom_call.1} parent=11 // pred_check
          %p229 = pneg %p173
        $region34: #{tpu_custom_call.1} parent=11 // pred_check_branch
          %231 = sbr.rel (%p229) target = $region36
        $region35: #{tpu_custom_call.1} parent=11 // pred_region
          _
        $region36: #{tpu_custom_call.1} parent=11 // pred_fallthru
          _
      $region12: #{tpu_custom_call.1} parent=5 // pred_fallthru
        _
      %p232 = scmp.lt.s32.totalorder %s21, 2
      // Predicated region
      $region37: #{tpu_custom_call.1} parent=5 // pred_check
        %p233 = pneg %p232
      $region38: #{tpu_custom_call.1} parent=5 // pred_check_branch
        %235 = sbr.rel (%p233) target = $region40
      $region39: #{tpu_custom_call.1} parent=5 // pred_region
        // Predicated region
        $region41: #{tpu_custom_call.1} parent=39 // pred_check
          %p236 = pneg %p41
        $region42: #{tpu_custom_call.1} parent=39 // pred_check_branch
          %238 = sbr.rel (%p236) target = $region44
        $region43: #{tpu_custom_call.1} parent=39 // pred_region
          %s239 = sand.u32 %s31, 1
          %s240 = scalar_lea.sflag [#allocation6], %s239
          %s241 = sand.u32 %s31, 1
          %s242 = smul.addr %s241, 32
          %s243 = scalar_lea.vmem [#allocation5], %s242
          %s245 = ssub.s32 512, 512
          %246 = vsyncadd %s240, %s245
          %s247 = smul.addr %s21, 4
          %s248 = smul.addr %s247, 128
          %s249 = scalar_lea.hbm %s1, %s248
          %s250 = sshll.u32 %s243, 4
          %s251 = int_to_ptr.vmem [resolvable:$true] %s250
          %256 = dma.hbm_to_vmem [thread:$0]  %s249, 512, %s251, %s240, 256, 256, 16
        $region44: #{tpu_custom_call.1} parent=39 // pred_fallthru
          _
      $region40: #{tpu_custom_call.1} parent=5 // pred_fallthru
        _
      %p257 = scmp.le.s32.totalorder 1, %s21
      %p258 = scmp.lt.s32.totalorder %s21, 3
      %p259 = pnand %p257, %p258
      %p260 = pneg %p259
      // Predicated region
      $region45: #{tpu_custom_call.1} parent=5 // pred_check
        _
      $region46: #{tpu_custom_call.1} parent=5 // pred_check_branch
        %262 = sbr.rel (%p259) target = $region48
      $region47: #{tpu_custom_call.1} parent=5 // pred_region
        %s263 = ssub.s32 %s21, 1
        %s264 = sand.u32 %s34, 1
        %s265 = scalar_lea.sflag [#allocation6], %s264
        %s266 = sand.u32 %s34, 1
        %s267 = smul.addr %s266, 32
        %s268 = scalar_lea.vmem [#allocation5], %s267
        // Predicated region
        $region49: #{tpu_custom_call.1} parent=47 // pred_check
          %p269 = pneg %p47
        $region50: #{tpu_custom_call.1} parent=47 // pred_check_branch
          %271 = sbr.rel (%p269) target = $region52
        $region51: #{tpu_custom_call.1} parent=47 // pred_region
          %272 = dma.done %s265, 512
        $region52: #{tpu_custom_call.1} parent=47 // pred_fallthru
          _
        %s273 = sand.u32 %s34, 1
        %s274 = scalar_lea.sflag [#allocation6], %s273
        %s275 = sand.u32 %s34, 1
        %s276 = smul.addr %s275, 32
        %s277 = scalar_lea.vmem [#allocation5], %s276
        %p278 = pneg %p47
        %p279 = pneg %p44
        %p280 = pneg %p68
        %p281 = pneg %p65
        %p282 = pneg %p89
        %p283 = pneg %p86
        %p284 = pneg %p110
        %p285 = pneg %p107
        %p286 = pneg %p131
        %p287 = pneg %p128
        %p288 = pneg %p152
        %p289 = pneg %p149
        %p290 = pneg %p173
        %p291 = pneg %p170
        %p292 = pneg %p199
        %p293 = pneg %p196
        %s294 = sand.u32 %s186, 1
        %s295 = scalar_lea.sflag [#allocation7], %s294
        %s296 = sand.u32 %s186, 1
        %s297 = smul.addr %s296, 32
        %s298 = scalar_lea.vmem [#allocation8], %s297
        %s299 = sld [smem:[#allocation4]]
        %v300 = vld [vmem:[%s2] sm:$0xff]
        %v301 = vld [vmem:[%s2 + $0x8] sm:$0xff]
        %v302 = vld [vmem:[%s3] sm:$0xff]
        %v303 = vld [vmem:[%s3 + $0x8] sm:$0xff]
        %v304 = vld [vmem:[%s268] sm:$0xff]
        %v305 = vld [vmem:[%s268 + $0x8] sm:$0xff]
        %v306 = vld [vmem:[%s268 + $0x10] sm:$0xff]
        %v307 = vld [vmem:[%s268 + $0x18] sm:$0xff]
        %309 = vset.pattern.permute.xlu0 0
        %310 = vperm.xlu0 %309, %v302
        %v311 = vpop.permute.xlu0 %310
        %314 = vset.pattern.permute.xlu0 0
        %315 = vperm.xlu0 %314, %v303
        %v316 = vpop.permute.xlu0 %315
        %vm318 = vcmask 130048
        %v320 = vsel %vm318, %v300, 0
        %v323 = vsel %vm318, %v301, 0
        %325 = vmatprep.subr.mxu0 %v305
        %326 = vmatpush1.msra.mxu0 %v304
        %327 = vmatprep.subr.mxu0 %v307
        %328 = vmatpush1.msra.mxu0 %v306
        %329 = vmatprep.subr.mxu0 0.0
        %330 = vmatpush1.msra.mxu0 0.0
        %331 = vmatprep.subr.mxu0 0.0
        %332 = vmatpush1.msra.mxu0 0.0
        %333 = vmatprep.subr.mxu0 0.0
        %334 = vmatpush1.msra.mxu0 0.0
        %335 = vmatprep.subr.mxu0 0.0
        %336 = vmatpush1.msra.mxu0 0.0
        %337 = vmatprep.subr.mxu0 0.0
        %338 = vmatpush1.msra.mxu0 0.0
        %339 = vmatprep.subr.mxu0 0.0
        %340 = vmatpush1.msra.mxu0 0.0
        %341 = vmatprep.subr.mxu0 0.0
        %342 = vmatpush1.msra.mxu0 0.0
        %343 = vmatprep.subr.mxu0 0.0
        %344 = vmatpush1.msra.mxu0 0.0
        %345 = vmatprep.subr.mxu0 0.0
        %346 = vmatpush1.msra.mxu0 0.0
        %347 = vmatprep.subr.mxu0 0.0
        %348 = vmatpush1.msra.mxu0 0.0
        %349 = vmatprep.subr.mxu0 0.0
        %350 = vmatpush1.msra.mxu0 0.0
        %351 = vmatprep.subr.mxu0 0.0
        %352 = vmatpush1.msra.mxu0 0.0
        %353 = vmatprep.subr.mxu0 0.0
        %354 = vmatpush1.msra.mxu0 0.0
        %355 = vmatprep.subr.mxu0 0.0
        %356 = vmatpush1.msra.mxu0 0.0
        %357 = vmatprep.subr.mxu0 0.0
        %358 = vmatpush1.msra.mxu0 0.0
        %359 = vmatprep.subr.mxu0 0.0
        %360 = vmatpush1.msra.mxu0 0.0
        %361 = vmatprep.subr.mxu0 0.0
        %362 = vmatpush1.msra.mxu0 0.0
        %363 = vmatprep.subr.mxu0 0.0
        %364 = vmatpush1.msra.mxu0 0.0
        %365 = vmatprep.subr.mxu0 0.0
        %366 = vmatpush1.msra.mxu0 0.0
        %367 = vmatprep.subr.mxu0 0.0
        %368 = vmatpush1.msra.mxu0 0.0
        %369 = vmatprep.subr.mxu0 0.0
        %370 = vmatpush1.msra.mxu0 0.0
        %371 = vmatprep.subr.mxu0 0.0
        %372 = vmatpush1.msra.mxu0 0.0
        %373 = vmatprep.subr.mxu0 0.0
        %374 = vmatpush1.msra.mxu0 0.0
        %375 = vmatprep.subr.mxu0 0.0
        %376 = vmatpush1.msra.mxu0 0.0
        %377 = vmatprep.subr.mxu0 0.0
        %378 = vmatpush1.msra.mxu0 0.0
        %379 = vmatprep.subr.mxu0 0.0
        %380 = vmatpush1.msra.mxu0 0.0
        %381 = vmatprep.subr.mxu0 0.0
        %382 = vmatpush1.msra.mxu0 0.0
        %383 = vmatprep.subr.mxu0 0.0
        %384 = vmatpush1.msra.mxu0 0.0
        %385 = vmatprep.subr.mxu0 0.0
        %386 = vmatpush1.msra.mxu0 0.0
        %387 = vmatprep.subr.mxu0 0.0
        %388 = vmatpush1.msra.mxu0 0.0
        %389 = vmatprep.mubr.f32.mxu0 0.0
        %390 = vmatmul.mubr.f32.gmra.mrb[0].mxu0 %v320
        %v391 = vpop.f32.mrb[0].mxu0
        %v392 = vadd.f32 %v311, %v391
        %v393 = vpop.f32.mrb[0].mxu0
        %v394 = vadd.f32 %v311, %v393
        %395 = vmatprep.mubr.f32.mxu0 0.0
        %396 = vmatmul.mubr.f32.gmra.mrb[0].mxu0 %v323
        %v397 = vpop.f32.mrb[0].mxu0
        %v398 = vadd.f32 %v316, %v397
        %v399 = vpop.f32.mrb[0].mxu0
        %v400 = vadd.f32 %v316, %v399
        %401 = vdwg.mxu0
        %vm402 = vcmp.ge.f32.partialorder %v392, 0.0
        %vm403 = vcmp.ge.f32.partialorder %v394, 0.0
        %vm404 = vcmp.ge.f32.partialorder %v398, 0.0
        %vm405 = vcmp.ge.f32.partialorder %v400, 0.0
        %v406 = vstv %s299
        %v407 = vmul.f32 %v406, %v392
        %v408 = vmul.f32 %v406, %v394
        %v409 = vmul.f32 %v406, %v398
        %v410 = vmul.f32 %v406, %v400
        %v411 = vsel %vm402, %v392, %v407
        %v412 = vsel %vm403, %v394, %v408
        %v413 = vsel %vm404, %v398, %v409
        %v414 = vsel %vm405, %v400, %v410
        %v415 = vadd.f32 %v411, %v412
        %416 = vadd.xlane.f32.xlu0 %v415
        %v417 = vpop.xlane.xlu0 %416
        %v418 = vadd.f32 %v413, %v414
        %419 = vadd.xlane.f32.xlu0 %v418
        %v420 = vpop.xlane.xlu0 %419
        %vm421 = vcmask 7168
        %422 = vst.msk [vmem:[#allocation2] sm:$0xff] %vm421, %v417
        %423 = vst.msk [vmem:[#allocation2 + $0x8] sm:$0xff] %vm421, %v420
        %v424 = vld [vmem:[#allocation2] sm:$0xff]
        %v425 = vld [vmem:[#allocation2 + $0x8] sm:$0xff]
        %v426 = vld [vmem:[%s4] sm:$0xff]
        %v427 = vld [vmem:[%s4 + $0x8] sm:$0xff]
        %v428 = vld [vmem:[%s5] sm:$0xff]
        %v429 = vld [vmem:[%s5 + $0x8] sm:$0xff]
        %v431 = vsel %vm318, %v426, 0
        %v434 = vsel %vm318, %v427, 0
        %436 = vmatprep.subr.mxu0 0.0
        %437 = vmatpush1.msra.mxu0 %v424
        %438 = vmatprep.subr.mxu0 0.0
        %439 = vmatpush1.msra.mxu0 %v425
        %440 = vmatprep.subr.mxu0 0.0
        %441 = vmatpush1.msra.mxu0 0.0
        %442 = vmatprep.subr.mxu0 0.0
        %443 = vmatpush1.msra.mxu0 0.0
        %444 = vmatprep.subr.mxu0 0.0
        %445 = vmatpush1.msra.mxu0 0.0
        %446 = vmatprep.subr.mxu0 0.0
        %447 = vmatpush1.msra.mxu0 0.0
        %448 = vmatprep.subr.mxu0 0.0
        %449 = vmatpush1.msra.mxu0 0.0
        %450 = vmatprep.subr.mxu0 0.0
        %451 = vmatpush1.msra.mxu0 0.0
        %452 = vmatprep.subr.mxu0 0.0
        %453 = vmatpush1.msra.mxu0 0.0
        %454 = vmatprep.subr.mxu0 0.0
        %455 = vmatpush1.msra.mxu0 0.0
        %456 = vmatprep.subr.mxu0 0.0
        %457 = vmatpush1.msra.mxu0 0.0
        %458 = vmatprep.subr.mxu0 0.0
        %459 = vmatpush1.msra.mxu0 0.0
        %460 = vmatprep.subr.mxu0 0.0
        %461 = vmatpush1.msra.mxu0 0.0
        %462 = vmatprep.subr.mxu0 0.0
        %463 = vmatpush1.msra.mxu0 0.0
        %464 = vmatprep.subr.mxu0 0.0
        %465 = vmatpush1.msra.mxu0 0.0
        %466 = vmatprep.subr.mxu0 0.0
        %467 = vmatpush1.msra.mxu0 0.0
        %468 = vmatprep.subr.mxu0 0.0
        %469 = vmatpush1.msra.mxu0 0.0
        %470 = vmatprep.subr.mxu0 0.0
        %471 = vmatpush1.msra.mxu0 0.0
        %472 = vmatprep.subr.mxu0 0.0
        %473 = vmatpush1.msra.mxu0 0.0
        %474 = vmatprep.subr.mxu0 0.0
        %475 = vmatpush1.msra.mxu0 0.0
        %476 = vmatprep.subr.mxu0 0.0
        %477 = vmatpush1.msra.mxu0 0.0
        %478 = vmatprep.subr.mxu0 0.0
        %479 = vmatpush1.msra.mxu0 0.0
        %480 = vmatprep.subr.mxu0 0.0
        %481 = vmatpush1.msra.mxu0 0.0
        %482 = vmatprep.subr.mxu0 0.0
        %483 = vmatpush1.msra.mxu0 0.0
        %484 = vmatprep.subr.mxu0 0.0
        %485 = vmatpush1.msra.mxu0 0.0
        %486 = vmatprep.subr.mxu0 0.0
        %487 = vmatpush1.msra.mxu0 0.0
        %488 = vmatprep.subr.mxu0 0.0
        %489 = vmatpush1.msra.mxu0 0.0
        %490 = vmatprep.subr.mxu0 0.0
        %491 = vmatpush1.msra.mxu0 0.0
        %492 = vmatprep.subr.mxu0 0.0
        %493 = vmatpush1.msra.mxu0 0.0
        %494 = vmatprep.subr.mxu0 0.0
        %495 = vmatpush1.msra.mxu0 0.0
        %496 = vmatprep.subr.mxu0 0.0
        %497 = vmatpush1.msra.mxu0 0.0
        %498 = vmatprep.subr.mxu0 0.0
        %499 = vmatpush1.msra.mxu0 0.0
        %500 = vmatprep.mubr.f32.mxu0 0.0
        %501 = vmatmul.mubr.f32.gmra.mrb[0].mxu0 %v431
        %v502 = vpop.f32.mrb[0].mxu0
        %v503 = vadd.f32 %v428, %v502
        %v504 = vpop.f32.mrb[0].mxu0
        %505 = vmatprep.mubr.f32.mxu0 0.0
        %506 = vmatmul.mubr.f32.gmra.mrb[0].mxu0 %v434
        %v507 = vpop.f32.mrb[0].mxu0
        %v508 = vadd.f32 %v429, %v507
        %v509 = vpop.f32.mrb[0].mxu0
        %510 = vdwg.mxu0
        %v511 = vmax.f32 %v503, 0.0
        %v512 = vmax.f32 %v508, 0.0
        %v513 = vld [vmem:[%s6] sm:$0xff]
        %v514 = vld [vmem:[%s6 + $0x8] sm:$0xff]
        %v515 = vld [vmem:[%s7] sm:$0xff]
        %v516 = vld [vmem:[%s7 + $0x8] sm:$0xff]
        %v518 = vsel %vm318, %v513, 0
        %v521 = vsel %vm318, %v514, 0
        %523 = vmatprep.subr.mxu0 0.0
        %524 = vmatpush1.msra.mxu0 %v511
        %525 = vmatprep.subr.mxu0 0.0
        %526 = vmatpush1.msra.mxu0 %v512
        %527 = vmatprep.subr.mxu0 0.0
        %528 = vmatpush1.msra.mxu0 0.0
        %529 = vmatprep.subr.mxu0 0.0
        %530 = vmatpush1.msra.mxu0 0.0
        %531 = vmatprep.subr.mxu0 0.0
        %532 = vmatpush1.msra.mxu0 0.0
        %533 = vmatprep.subr.mxu0 0.0
        %534 = vmatpush1.msra.mxu0 0.0
        %535 = vmatprep.subr.mxu0 0.0
        %536 = vmatpush1.msra.mxu0 0.0
        %537 = vmatprep.subr.mxu0 0.0
        %538 = vmatpush1.msra.mxu0 0.0
        %539 = vmatprep.subr.mxu0 0.0
        %540 = vmatpush1.msra.mxu0 0.0
        %541 = vmatprep.subr.mxu0 0.0
        %542 = vmatpush1.msra.mxu0 0.0
        %543 = vmatprep.subr.mxu0 0.0
        %544 = vmatpush1.msra.mxu0 0.0
        %545 = vmatprep.subr.mxu0 0.0
        %546 = vmatpush1.msra.mxu0 0.0
        %547 = vmatprep.subr.mxu0 0.0
        %548 = vmatpush1.msra.mxu0 0.0
        %549 = vmatprep.subr.mxu0 0.0
        %550 = vmatpush1.msra.mxu0 0.0
        %551 = vmatprep.subr.mxu0 0.0
        %552 = vmatpush1.msra.mxu0 0.0
        %553 = vmatprep.subr.mxu0 0.0
        %554 = vmatpush1.msra.mxu0 0.0
        %555 = vmatprep.subr.mxu0 0.0
        %556 = vmatpush1.msra.mxu0 0.0
        %557 = vmatprep.subr.mxu0 0.0
        %558 = vmatpush1.msra.mxu0 0.0
        %559 = vmatprep.subr.mxu0 0.0
        %560 = vmatpush1.msra.mxu0 0.0
        %561 = vmatprep.subr.mxu0 0.0
        %562 = vmatpush1.msra.mxu0 0.0
        %563 = vmatprep.subr.mxu0 0.0
        %564 = vmatpush1.msra.mxu0 0.0
        %565 = vmatprep.subr.mxu0 0.0
        %566 = vmatpush1.msra.mxu0 0.0
        %567 = vmatprep.subr.mxu0 0.0
        %568 = vmatpush1.msra.mxu0 0.0
        %569 = vmatprep.subr.mxu0 0.0
        %570 = vmatpush1.msra.mxu0 0.0
        %571 = vmatprep.subr.mxu0 0.0
        %572 = vmatpush1.msra.mxu0 0.0
        %573 = vmatprep.subr.mxu0 0.0
        %574 = vmatpush1.msra.mxu0 0.0
        %575 = vmatprep.subr.mxu0 0.0
        %576 = vmatpush1.msra.mxu0 0.0
        %577 = vmatprep.subr.mxu0 0.0
        %578 = vmatpush1.msra.mxu0 0.0
        %579 = vmatprep.subr.mxu0 0.0
        %580 = vmatpush1.msra.mxu0 0.0
        %581 = vmatprep.subr.mxu0 0.0
        %582 = vmatpush1.msra.mxu0 0.0
        %583 = vmatprep.subr.mxu0 0.0
        %584 = vmatpush1.msra.mxu0 0.0
        %585 = vmatprep.subr.mxu0 0.0
        %586 = vmatpush1.msra.mxu0 0.0
        %587 = vmatprep.mubr.f32.mxu0 0.0
        %588 = vmatmul.mubr.f32.gmra.mrb[0].mxu0 %v518
        %v589 = vpop.f32.mrb[0].mxu0
        %v590 = vadd.f32 %v515, %v589
        %v591 = vpop.f32.mrb[0].mxu0
        %592 = vmatprep.mubr.f32.mxu0 0.0
        %593 = vmatmul.mubr.f32.gmra.mrb[0].mxu0 %v521
        %v594 = vpop.f32.mrb[0].mxu0
        %v595 = vadd.f32 %v516, %v594
        %v596 = vpop.f32.mrb[0].mxu0
        %597 = vdwg.mxu0
        %v598 = vxor.u32 %v590, 2147483648
        %v599 = vxor.u32 %v595, 2147483648
        %v600 = vmul.f32 %v598, 1.442695
        %v601 = vpow.pop %v600
        %v602 = vmul.f32 %v599, 1.442695
        %v603 = vpow.pop %v602
        %v604 = vadd.f32 %v601, 1.0
        %v605 = vadd.f32 %v603, 1.0
        %v606 = vrcp.pop %v604
        %v607 = vmul.f32 1.0, %v606
        %v608 = vrcp.pop %v605
        %v609 = vmul.f32 1.0, %v608
        %v610 = vld [vmem:[%s268] sm:$0xff]
        %v611 = vld [vmem:[%s268 + $0x8] sm:$0xff]
        %v612 = vld [vmem:[%s268 + $0x10] sm:$0xff]
        %v613 = vld [vmem:[%s268 + $0x18] sm:$0xff]
        %615 = vset.pattern.permute.xlu0 0
        %616 = vperm.xlu0 %615, %v607
        %v617 = vpop.permute.xlu0 %616
        %620 = vset.pattern.permute.xlu0 0
        %621 = vperm.xlu0 %620, %v609
        %v622 = vpop.permute.xlu0 %621
        %v624 = vmul.f32 %v617, %v610
        %v625 = vmul.f32 %v617, %v611
        %v626 = vmul.f32 %v622, %v612
        %v627 = vmul.f32 %v622, %v613
        %628 = vst [vmem:[%s298] sm:$0xff] %v624
        %629 = vst [vmem:[%s298 + $0x8] sm:$0xff] %v625
        %630 = vst [vmem:[%s298 + $0x10] sm:$0xff] %v626
        %631 = vst [vmem:[%s298 + $0x18] sm:$0xff] %v627
        %s632 = sand.u32 %s186, 1
        %s633 = scalar_lea.sflag [#allocation7], %s632
        %s634 = sand.u32 %s186, 1
        %s635 = smul.addr %s634, 32
        %s636 = scalar_lea.vmem [#allocation8], %s635
        // Predicated region
        $region53: #{tpu_custom_call.1} parent=47 // pred_check
          %p637 = pneg %p196
        $region54: #{tpu_custom_call.1} parent=47 // pred_check_branch
          %639 = sbr.rel (%p637) target = $region56
        $region55: #{tpu_custom_call.1} parent=47 // pred_region
          %s641 = ssub.s32 512, 512
          %642 = vsyncadd %s633, %s641
          %s643 = smul.addr %s26, 4
          %s644 = smul.addr %s643, 128
          %s645 = scalar_lea.hbm %s8, %s644
          %s646 = sshll.u32 %s636, 4
          %s647 = int_to_ptr.vmem [resolvable:$true] %s646
          %652 = dma.vmem_to_hbm [thread:$0]  %s647, 512, %s645, %s633, 256, 256, 16
        $region56: #{tpu_custom_call.1} parent=47 // pred_fallthru
          _
      $region48: #{tpu_custom_call.1} parent=5 // pred_fallthru
        _
      %p653 = scmp.le.s32.totalorder 2, %s21
      // Predicated region
      $region57: #{tpu_custom_call.1} parent=5 // pred_check
        %p654 = pneg %p653
      $region58: #{tpu_custom_call.1} parent=5 // pred_check_branch
        %656 = sbr.rel (%p654) target = $region60
      $region59: #{tpu_custom_call.1} parent=5 // pred_region
        %s657 = ssub.s32 %s21, 2
        // Predicated region
        $region61: #{tpu_custom_call.1} parent=59 // pred_check
          %p658 = pneg %p202
        $region62: #{tpu_custom_call.1} parent=59 // pred_check_branch
          %660 = sbr.rel (%p658) target = $region64
        $region63: #{tpu_custom_call.1} parent=59 // pred_region
          %s661 = sand.u32 %s187, 1
          %s662 = scalar_lea.sflag [#allocation7], %s661
          %s663 = sand.u32 %s187, 1
          %s664 = smul.addr %s663, 32
          %s665 = scalar_lea.vmem [#allocation8], %s664
          %666 = dma.done %s662, 512
        $region64: #{tpu_custom_call.1} parent=59 // pred_fallthru
          _
      $region60: #{tpu_custom_call.1} parent=5 // pred_fallthru
        _
    $region6: #{tpu_custom_call.1} parent=1 // loop_footer
      %s25 = sadd.s32 1, %s21
    $region7: #{tpu_custom_call.1} parent=1 // loop_footer_branch
      %20 = sbr.rel target = $region3
    $region8: #{tpu_custom_call.1} parent=1 // loop_exit
      _
    %667 = vsyncpa [#allocation6], 1
    %s668 = scalar_lea.sflag [#allocation6], 1
    %669 = vsyncpa %s668, 1
    %670 = vsyncpa [#allocation7], 1
    %s671 = scalar_lea.sflag [#allocation7], 1
    %672 = vsyncpa %s671, 1

</llo_original>
